<compile_context>
chip_gen: v7x
topology: tpu7x:2x2x1
jax: 0.10.0
libtpu: 0.0.40
codegen_flags: <defaults>
</compile_context>

<pallas_src>
import jax
import jax.numpy as jnp
from jax.experimental import pallas as pl
from jax.experimental.pallas import tpu as pltpu


def _round_up(x, mult):
    return ((x + mult - 1) // mult) * mult


def _cdiv(a, b):
    return (a + b - 1) // b


def _linear_relu_kernel(x_ref, w_ref, b_ref, o_ref):
    # x_ref: [TILE_M, K]  w_ref: [K, TILE_N]  b_ref: [1, TILE_N]  o_ref: [TILE_M, TILE_N]
    acc = jnp.dot(x_ref[...], w_ref[...], preferred_element_type=jnp.float32)
    acc = acc + b_ref[...]                      # f32 bias add (VPU)
    o_ref[...] = jnp.maximum(acc, 0.0).astype(o_ref.dtype)


def _vmem_budget():
    """Per-generation VMEM tile budget + scoped limit (v5e/v6e 128 MiB, v7x 64 MiB)."""
    cap = 64 * 1024 * 1024                      # conservative default (v7x per-core)
    try:
        info = pltpu.get_tpu_info()
        cap_q = int(getattr(info, "vmem_capacity_bytes", 0) or 0)
        if cap_q > 0:
            cap = min(cap_q, 128 * 1024 * 1024)
    except Exception:
        pass
    budget = int(cap * 0.70)                    # what the tile picker may plan to use
    limit = int(cap * 0.85)                     # scoped VMEM limit handed to Mosaic
    return budget, limit


def _choose_tiles(m, in_dim, out_dim, x_item, w_item, out_item, budget,
                  tile_m_max, tile_n):
    # ---- N axis: keep W resident if it comfortably fits, else stream 256-wide blocks.
    if tile_n is None:
        w_resident = 2 * in_dim * out_dim * w_item      # counted double-buffered
        tile_n = out_dim if w_resident <= 0.4 * budget else 256
    if tile_n >= out_dim:
        tile_n = out_dim                                # full dim: always layout-legal
    else:
        tile_n = max(128, (tile_n // 128) * 128)        # sub-tiles must be x128
    n_tiles = _cdiv(out_dim, tile_n)

    # ---- M axis: biggest row tile whose (double-buffered) footprint fits the budget.
    m8 = _round_up(max(m, 1), 8)
    fits, seen = [], set()
    for cand in (2048, 1024, 512, 256, 128, 64, 32, 16, 8):
        if cand > max(tile_m_max, 8):
            continue
        tile = min(cand, m8)
        if tile in seen:
            continue
        seen.add(tile)
        foot = (2 * in_dim * tile_n * w_item            # W (conservative 2 buffers)
                + 2 * tile_n * 4                        # bias
                + 2 * tile * in_dim * x_item            # x double buffer
                + 2 * tile * tile_n * out_item          # out double buffer
                + tile * tile_n * 4)                    # f32 accumulator temporaries
        if foot <= budget:
            fits.append((tile, _cdiv(m, tile) * n_tiles))

    if not fits:
        return 8, tile_n, n_tiles                       # rely on the scoped VMEM limit

    tile_m, total = fits[0]
    # Megacore balance: a small odd step count (>1) leaves one TensorCore ~idle.
    if 1 < total < 8 and total % 2 == 1:
        for t, tot in fits:
            if tot % 2 == 0 or tot >= 8:
                tile_m = t
                break
    return tile_m, tile_n, n_tiles


def _pallas_linear_relu(x2d, w, b2d, out_dtype, tile_m, tile_n, vmem_limit,
                        buffer_resident):
    m, in_dim = x2d.shape
    n = w.shape[1]
    grid = (_cdiv(m, tile_m), _cdiv(n, tile_n))

    # Constant-index W/bias only need one buffer (no re-DMA across the grid).
    res_kwargs = {"pipeline_mode": pl.Buffered(1)} if buffer_resident else {}

    cost = pl.CostEstimate(
        flops=2 * m * in_dim * n,
        transcendentals=0,
        bytes_accessed=(x2d.size * x2d.dtype.itemsize + w.size * w.dtype.itemsize
                        + b2d.size * 4 + m * n * jnp.dtype(out_dtype).itemsize),
    )

    return pl.pallas_call(
        _linear_relu_kernel,
        out_shape=jax.ShapeDtypeStruct((m, n), out_dtype),
        grid_spec=pltpu.PrefetchScalarGridSpec(
            num_scalar_prefetch=0,
            grid=grid,
            in_specs=[
                pl.BlockSpec((tile_m, in_dim), lambda i, j: (i, 0)),            # x: streamed over M
                pl.BlockSpec((in_dim, tile_n), lambda i, j: (0, j), **res_kwargs),  # W
                pl.BlockSpec((1, tile_n), lambda i, j: (0, j), **res_kwargs),       # bias
            ],
            out_specs=pl.BlockSpec((tile_m, tile_n), lambda i, j: (i, j)),
        ),
        compiler_params=pltpu.CompilerParams(
            dimension_semantics=("parallel", "parallel"),
            vmem_limit_bytes=vmem_limit,
        ),
        cost_estimate=cost,
    )(x2d, w, b2d)


def transformer_down(x, y, weight_t, bias, *, out_dtype=None, tile_m_max=1024,
                     tile_n=None, force_pallas=False):
    """
    x:        [b, p, 1, in_dim]
    y:        [b, p, k, in_dim]   (unused, kept for API parity with the module)
    weight_t: [in_dim, out_dim]   (transpose of PyTorch nn.Linear weight)
    bias:     [out_dim]
    Pass bf16 x / weight_t to halve HBM traffic (f32 accumulation is kept).
    returns:  [b, p, 1, out_dim] in out_dtype (default: x.dtype)
    """
    del y  # unused by the reference forward pass
    b, p, one, in_dim = x.shape
    out_dim = weight_t.shape[1]
    out_dtype = out_dtype or x.dtype
    m = b * p * one

    # Metadata-only reshapes; no wrapper-side pad / cast / slice HBM passes.
    x2d = x.reshape(m, in_dim)
    w = weight_t
    b2d = bias.reshape(1, out_dim).astype(jnp.float32)   # tiny; keeps bias add in f32

    # Tiny problems: pallas_call launch overhead exceeds the work; let XLA fuse it.
    if not force_pallas and m * in_dim * out_dim <= 64 * 128 * 128:
        out2d = jnp.maximum(
            jnp.dot(x2d, w, preferred_element_type=jnp.float32) + b2d, 0.0
        ).astype(out_dtype)
        return out2d.reshape(b, p, one, out_dim)

    budget, vmem_limit = _vmem_budget()
    tile_m, tile_n_eff, n_tiles = _choose_tiles(
        m, in_dim, out_dim, x2d.dtype.itemsize, w.dtype.itemsize,
        jnp.dtype(out_dtype).itemsize, budget, tile_m_max, tile_n)

    # TODO(synk): for in_dim so large that even an (in_dim, 256) W block overflows
    # VMEM, a K-reduction grid axis with an f32 accumulator scratch would be needed.

    buffer_resident = n_tiles == 1
    try:
        out2d = _pallas_linear_relu(x2d, w, b2d, out_dtype, tile_m, tile_n_eff,
                                    vmem_limit, buffer_resident)
    except Exception:
        if not buffer_resident:
            raise
        # Fallback if pl.Buffered(1) is rejected by this jax/Mosaic version.
        out2d = _pallas_linear_relu(x2d, w, b2d, out_dtype, tile_m, tile_n_eff,
                                    vmem_limit, False)

    return out2d.reshape(b, p, one, out_dim)


def init_linear_params(key, in_dim, out_dim, dtype=jnp.float32):
    """Deterministic init mirroring nn.Linear's default (uniform ±1/sqrt(in_dim))."""
    k_w, k_b = jax.random.split(key)
    bound = 1.0 / jnp.sqrt(jnp.asarray(in_dim, dtype))
    # PyTorch stores weight as [out_dim, in_dim]; we store the transpose.
    weight = jax.random.uniform(k_w, (out_dim, in_dim), dtype, -bound, bound)
    bias = jax.random.uniform(k_b, (out_dim,), dtype, -bound, bound)
    return weight.T, bias  # [in_dim, out_dim], [out_dim]


if __name__ == "__main__":
    key = jax.random.PRNGKey(0)
    k_x, k_y, k_p, k_x2, k_y2, k_p2 = jax.random.split(key, 6)

    def reference(xv, wv, bv):
        out = jnp.einsum("bpqd,de->bpqe", xv, wv,
                         precision=jax.lax.Precision.HIGHEST) + bv
        return jnp.maximum(out, 0.0)

    # ---- tiny docstring shapes: XLA-fallback path + forced single-block Pallas ----
    b, p, k_neigh, in_dim, out_dim = 2, 8, 4, 32, 64
    x = jax.random.normal(k_x, (b, p, 1, in_dim), jnp.float32)
    y = jax.random.normal(k_y, (b, p, k_neigh, in_dim), jnp.float32)
    weight_t, bias = init_linear_params(k_p, in_dim, out_dim)
    ref = reference(x, weight_t, bias)

    out = jax.block_until_ready(transformer_down(x, y, weight_t, bias))
    assert out.shape == (b, p, 1, out_dim), out.shape
    assert jnp.allclose(out, ref, atol=1e-4, rtol=1e-4)

    out_pl = jax.block_until_ready(
        transformer_down(x, y, weight_t, bias, force_pallas=True))
    assert out_pl.shape == (b, p, 1, out_dim), out_pl.shape
    assert jnp.allclose(out_pl, ref, atol=1e-4, rtol=1e-4)

    # ---- larger shapes: multi-tile M grid with a ragged (masked) last block ----
    b2, p2, in_dim2, out_dim2 = 2, 576, 96, 192        # M = 1152 -> 2 tiles of 1024
    x_l = jax.random.normal(k_x2, (b2, p2, 1, in_dim2), jnp.float32)
    y_l = jax.random.normal(k_y2, (b2, p2, 4, in_dim2), jnp.float32)
    w_l, bias_l = init_linear_params(k_p2, in_dim2, out_dim2)
    ref_l = reference(x_l, w_l, bias_l)

    out_l = jax.block_until_ready(transformer_down(x_l, y_l, w_l, bias_l))
    assert out_l.shape == (b2, p2, 1, out_dim2), out_l.shape
    assert jnp.allclose(out_l, ref_l, atol=1e-4, rtol=1e-4)

    # smaller forced tiles: exercises >=8-step pipelining + megacore rebalance path
    out_t = jax.block_until_ready(
        transformer_down(x_l, y_l, w_l, bias_l, tile_m_max=256))
    assert jnp.allclose(out_t, ref_l, atol=1e-4, rtol=1e-4)

    # forced N tiling: exercises the streamed-W path with a ragged last N block
    out_n = jax.block_until_ready(
        transformer_down(x_l, y_l, w_l, bias_l, tile_n=128))
    assert jnp.allclose(out_n, ref_l, atol=1e-4, rtol=1e-4)

    # ---- bf16 operands already in HBM (no cast pass inside the op), bf16 output ----
    x_bf, w_bf = x_l.astype(jnp.bfloat16), w_l.astype(jnp.bfloat16)
    out_bf = jax.block_until_ready(transformer_down(x_bf, y_l, w_bf, bias_l))
    ref_bf = jnp.maximum(
        jnp.einsum("bpqd,de->bpqe", x_bf, w_bf,
                   preferred_element_type=jnp.float32) + bias_l, 0.0
    ).astype(jnp.bfloat16)
    assert out_bf.shape == (b2, p2, 1, out_dim2), out_bf.shape
    assert out_bf.dtype == jnp.bfloat16
    assert jnp.allclose(out_bf.astype(jnp.float32), ref_bf.astype(jnp.float32),
                        atol=2e-2, rtol=2e-2)

    print("KERNEL_OK")
</pallas_src>

<mosaic_0001>
module attributes {stable_mosaic.version = 11 : i64} {
  func.func @_linear_relu_kernel(%arg0: i32, %arg1: i32, %arg2: memref<16x32xf32, #tpu.memory_space<vmem>>, %arg3: memref<32x64xf32, #tpu.memory_space<vmem>>, %arg4: memref<1x64xf32, #tpu.memory_space<vmem>>, %arg5: memref<16x64xf32, #tpu.memory_space<vmem>>) attributes {dimension_semantics = [#tpu.dimension_semantics<parallel>, #tpu.dimension_semantics<parallel>], iteration_bounds = array<i64: 1, 1>, scalar_prefetch = 0 : i64, scratch_operands = 0 : i64, tpu.core_type = #tpu.core_type<tc>, window_params = [{transform_indices = @transform_0, window_bounds = array<i64: 16, 32>}, {pipeline_mode = #tpu.pipeline_mode<synchronous>, transform_indices = @transform_1, window_bounds = array<i64: 32, 64>}, {pipeline_mode = #tpu.pipeline_mode<synchronous>, transform_indices = @transform_2, window_bounds = array<i64: 1, 64>}, {transform_indices = @transform_3, window_bounds = array<i64: 16, 64>}]} {
    %c0 = arith.constant 0 : index
    %c0_0 = arith.constant 0 : index
    %0 = vector.load %arg2[%c0, %c0_0] : memref<16x32xf32, #tpu.memory_space<vmem>>, vector<16x32xf32>
    %c0_1 = arith.constant 0 : index
    %c0_2 = arith.constant 0 : index
    %1 = vector.load %arg3[%c0_1, %c0_2] : memref<32x64xf32, #tpu.memory_space<vmem>>, vector<32x64xf32>
    %cst = arith.constant dense<0.000000e+00> : vector<16x64xf32>
    %2 = tpu.matmul %0, %1, %cst {dimension_numbers = #tpu.dot_dimension_numbers<[1], [0], [0], [1], [0, 0, 1, 1], [], []>} : vector<16x32xf32>, vector<32x64xf32>, vector<16x64xf32> -> vector<16x64xf32>
    %c0_3 = arith.constant 0 : index
    %c0_4 = arith.constant 0 : index
    %3 = vector.load %arg4[%c0_3, %c0_4] : memref<1x64xf32, #tpu.memory_space<vmem>>, vector<1x64xf32>
    %4 = vector.broadcast %3 : vector<1x64xf32> to vector<16x64xf32>
    %5 = arith.addf %2, %4 : vector<16x64xf32>
    %cst_5 = arith.constant 0.000000e+00 : f32
    %6 = vector.broadcast %cst_5 : f32 to vector<16x64xf32>
    %7 = arith.maximumf %5, %6 : vector<16x64xf32>
    %c0_6 = arith.constant 0 : index
    %c0_7 = arith.constant 0 : index
    %8 = vector.load %arg5[%c0_6, %c0_7] : memref<16x64xf32, #tpu.memory_space<vmem>>, vector<16x64xf32>
    tpu.vector_store %arg5[%c0_6, %c0_7], %7 {strides = array<i32>} : memref<16x64xf32, #tpu.memory_space<vmem>>, vector<16x64xf32>,
    return
  }
  func.func @transform_0(%arg0: i32, %arg1: i32) -> (i32, i32) {
    %c0_i32 = arith.constant 0 : i32
    %c0_i32_0 = arith.constant 0 : i32
    return %arg0, %c0_i32 : i32, i32
  }
  func.func @transform_1(%arg0: i32, %arg1: i32) -> (i32, i32) {
    %c0_i32 = arith.constant 0 : i32
    %c0_i32_0 = arith.constant 0 : i32
    return %c0_i32, %arg1 : i32, i32
  }
  func.func @transform_2(%arg0: i32, %arg1: i32) -> (i32, i32) {
    %c0_i32 = arith.constant 0 : i32
    %c0_i32_0 = arith.constant 0 : i32
    return %c0_i32, %arg1 : i32, i32
  }
  func.func @transform_3(%arg0: i32, %arg1: i32) -> (i32, i32) {
    %c0_i32 = arith.constant 0 : i32
    return %arg0, %arg1 : i32, i32
  }
}

module attributes {stable_mosaic.version = 11 : i64} {
  func.func @_linear_relu_kernel(%arg0: i32, %arg1: i32, %arg2: memref<16x32xf32, #tpu.memory_space<vmem>>, %arg3: memref<32x64xf32, #tpu.memory_space<vmem>>, %arg4: memref<1x64xf32, #tpu.memory_space<vmem>>, %arg5: memref<16x64xf32, #tpu.memory_space<vmem>>) attributes {dimension_semantics = [#tpu.dimension_semantics<parallel>, #tpu.dimension_semantics<parallel>], iteration_bounds = array<i64: 1, 1>, scalar_prefetch = 0 : i64, scratch_operands = 0 : i64, tpu.core_type = #tpu.core_type<tc>, window_params = [{transform_indices = @transform_0, window_bounds = array<i64: 16, 32>}, {transform_indices = @transform_1, window_bounds = array<i64: 32, 64>}, {transform_indices = @transform_2, window_bounds = array<i64: 1, 64>}, {transform_indices = @transform_3, window_bounds = array<i64: 16, 64>}]} {
    %c0 = arith.constant 0 : index
    %c0_0 = arith.constant 0 : index
    %0 = vector.load %arg2[%c0, %c0_0] : memref<16x32xf32, #tpu.memory_space<vmem>>, vector<16x32xf32>
    %c0_1 = arith.constant 0 : index
    %c0_2 = arith.constant 0 : index
    %1 = vector.load %arg3[%c0_1, %c0_2] : memref<32x64xf32, #tpu.memory_space<vmem>>, vector<32x64xf32>
    %cst = arith.constant dense<0.000000e+00> : vector<16x64xf32>
    %2 = tpu.matmul %0, %1, %cst {dimension_numbers = #tpu.dot_dimension_numbers<[1], [0], [0], [1], [0, 0, 1, 1], [], []>} : vector<16x32xf32>, vector<32x64xf32>, vector<16x64xf32> -> vector<16x64xf32>
    %c0_3 = arith.constant 0 : index
    %c0_4 = arith.constant 0 : index
    %3 = vector.load %arg4[%c0_3, %c0_4] : memref<1x64xf32, #tpu.memory_space<vmem>>, vector<1x64xf32>
    %4 = vector.broadcast %3 : vector<1x64xf32> to vector<16x64xf32>
    %5 = arith.addf %2, %4 : vector<16x64xf32>
    %cst_5 = arith.constant 0.000000e+00 : f32
    %6 = vector.broadcast %cst_5 : f32 to vector<16x64xf32>
    %7 = arith.maximumf %5, %6 : vector<16x64xf32>
    %c0_6 = arith.constant 0 : index
    %c0_7 = arith.constant 0 : index
    %8 = vector.load %arg5[%c0_6, %c0_7] : memref<16x64xf32, #tpu.memory_space<vmem>>, vector<16x64xf32>
    tpu.vector_store %arg5[%c0_6, %c0_7], %7 {strides = array<i32>} : memref<16x64xf32, #tpu.memory_space<vmem>>, vector<16x64xf32>,
    return
  }
  func.func @transform_0(%arg0: i32, %arg1: i32) -> (i32, i32) {
    %c0_i32 = arith.constant 0 : i32
    %c0_i32_0 = arith.constant 0 : i32
    return %arg0, %c0_i32 : i32, i32
  }
  func.func @transform_1(%arg0: i32, %arg1: i32) -> (i32, i32) {
    %c0_i32 = arith.constant 0 : i32
    %c0_i32_0 = arith.constant 0 : i32
    return %c0_i32, %arg1 : i32, i32
  }
  func.func @transform_2(%arg0: i32, %arg1: i32) -> (i32, i32) {
    %c0_i32 = arith.constant 0 : i32
    %c0_i32_0 = arith.constant 0 : i32
    return %c0_i32, %arg1 : i32, i32
  }
  func.func @transform_3(%arg0: i32, %arg1: i32) -> (i32, i32) {
    %c0_i32 = arith.constant 0 : i32
    return %arg0, %arg1 : i32, i32
  }
}

</mosaic_0001>

<llo_original>
// kernel: tpu_custom_call.1
$region0: #{tpu_custom_call.1}
  #allocation0 [shape = 'u32[]', space=smem, size = 0x4, offset = 0x4, fixed_abs, tag = 'smem constant byte address 0x4 - core index']
  #allocation1 [shape = 'u32[144,128]{1,0:T(1,128)}', space=vmem, size = 0x12000, scoped, tag = 'internal scratch']
  %s0 = inlined_call_operand.hbm [shape: f32[16,32], index: 0, kind: input, shape index: {}]
  %s1 = inlined_call_operand.hbm [shape: f32[32,64], index: 1, kind: input, shape index: {}]
  %s2 = inlined_call_operand.vmem [shape: f32[1,64], index: 2, kind: input, shape index: {}]
  %s3 = inlined_call_operand.hbm [shape: f32[16,64], index: 3, kind: output, shape index: {}]
  %s4 = sld [smem:[#allocation0]]
  $region30: #{tpu_custom_call.1} parent=0
    _
  %s6 = ssub.s32 1, %s4
  %s7 = scalar_select 0, %s6, %s4
  $region1: #{tpu_custom_call.1} parent=0
    #allocation2 [shape = 'u8[8192]{0}', space=vmem, size = 0x2000, scoped, tag = 'input window, operand 0, single buffered']
    #allocation3 [shape = 's32[1]{0}', space=sflag, size = 0x4, scoped, tag = 'scoped memory for tpu_custom_call.1']
    #allocation4 [shape = 's32[1]{0}', space=sflag, size = 0x4, scoped, tag = 'scoped memory for tpu_custom_call.1']
    #allocation5 [shape = 'u8[16384]{0}', space=vmem, size = 0x4000, scoped, tag = 'input window, operand 1, single buffered']
    #allocation6 [shape = 's32[1]{0}', space=sflag, size = 0x4, scoped, tag = 'scoped memory for tpu_custom_call.1']
    #allocation7 [shape = 'u8[8192]{0}', space=vmem, size = 0x2000, scoped, tag = 'output window, operand 0, single buffered']
    %8 = vsyncpa [#allocation3], 0
    %9 = vsyncpa [#allocation6], 0
    %10 = vsyncpa [#allocation4], 0
    // Predicated region
    $region2: #{tpu_custom_call.1} parent=1 // pred_check
      _
    $region3: #{tpu_custom_call.1} parent=1 // pred_check_branch
      %12 = sbr.rel (0) target = $region5
    $region4: #{tpu_custom_call.1} parent=1 // pred_region
      %s14 = ssub.s32 256, 256
      %15 = vsyncadd [#allocation3], %s14
      %s16 = sshll.u32 [#allocation2], 4
      %s17 = int_to_ptr.vmem [resolvable:$true] %s16
      %22 = dma.hbm_to_vmem [thread:$0]  %s0, 256, %s17, [#allocation3], 128, 128, 8
    $region5: #{tpu_custom_call.1} parent=1 // pred_fallthru
      _
    // Predicated region
    $region6: #{tpu_custom_call.1} parent=1 // pred_check
      _
    $region7: #{tpu_custom_call.1} parent=1 // pred_check_branch
      %24 = sbr.rel (0) target = $region9
    $region8: #{tpu_custom_call.1} parent=1 // pred_region
      %s26 = ssub.s32 512, 512
      %27 = vsyncadd [#allocation6], %s26
      %s28 = sshll.u32 [#allocation5], 4
      %s29 = int_to_ptr.vmem [resolvable:$true] %s28
      %34 = dma.hbm_to_vmem [thread:$0]  %s1, 512, %s29, [#allocation6], 128, 128, 8
    $region9: #{tpu_custom_call.1} parent=1 // pred_fallthru
      _
    // Predicated region
    $region10: #{tpu_custom_call.1} parent=1 // pred_check
      _
    $region11: #{tpu_custom_call.1} parent=1 // pred_check_branch
      %36 = sbr.rel (0) target = $region13
    $region12: #{tpu_custom_call.1} parent=1 // pred_region
      _
    $region13: #{tpu_custom_call.1} parent=1 // pred_fallthru
      _
    // Predicated region
    $region14: #{tpu_custom_call.1} parent=1 // pred_check
      _
    $region15: #{tpu_custom_call.1} parent=1 // pred_check_branch
      %38 = sbr.rel (0) target = $region17
    $region16: #{tpu_custom_call.1} parent=1 // pred_region
      %39 = dma.done [#allocation3], 256
    $region17: #{tpu_custom_call.1} parent=1 // pred_fallthru
      _
    // Predicated region
    $region18: #{tpu_custom_call.1} parent=1 // pred_check
      _
    $region19: #{tpu_custom_call.1} parent=1 // pred_check_branch
      %41 = sbr.rel (0) target = $region21
    $region20: #{tpu_custom_call.1} parent=1 // pred_region
      %42 = dma.done [#allocation6], 512
    $region21: #{tpu_custom_call.1} parent=1 // pred_fallthru
      _
    %v43 = vld [vmem:[#allocation2] sm:$0xff]
    %v44 = vld [vmem:[#allocation2 + $0x8] sm:$0xff]
    %v45 = vld [vmem:[#allocation5] sm:$0xff]
    %v46 = vld [vmem:[#allocation5 + $0x8] sm:$0xff]
    %v47 = vld [vmem:[#allocation5 + $0x10] sm:$0xff]
    %v48 = vld [vmem:[#allocation5 + $0x18] sm:$0xff]
    %v49 = vld [vmem:[%s2] sm:$0x1]
    %v51 = vlaneseq
    %v52 = vshrl.u32 %v51, 7
    %v53 = vsub.s32 0, %v52
    %v54 = vrot.slane %v49, %v53
    %vm56 = vcmask 261120
    %v58 = vsel %vm56, %v43, 0
    %v61 = vsel %vm56, %v44, 0
    %63 = vmatprep.subr.mxu0 0.0
    %64 = vmatpush1.msra.mxu0 %v45
    %65 = vmatprep.subr.mxu0 0.0
    %66 = vmatpush1.msra.mxu0 %v46
    %67 = vmatprep.subr.mxu0 0.0
    %68 = vmatpush1.msra.mxu0 %v47
    %69 = vmatprep.subr.mxu0 0.0
    %70 = vmatpush1.msra.mxu0 %v48
    %71 = vmatprep.subr.mxu0 0.0
    %72 = vmatpush1.msra.mxu0 0.0
    %73 = vmatprep.subr.mxu0 0.0
    %74 = vmatpush1.msra.mxu0 0.0
    %75 = vmatprep.subr.mxu0 0.0
    %76 = vmatpush1.msra.mxu0 0.0
    %77 = vmatprep.subr.mxu0 0.0
    %78 = vmatpush1.msra.mxu0 0.0
    %79 = vmatprep.subr.mxu0 0.0
    %80 = vmatpush1.msra.mxu0 0.0
    %81 = vmatprep.subr.mxu0 0.0
    %82 = vmatpush1.msra.mxu0 0.0
    %83 = vmatprep.subr.mxu0 0.0
    %84 = vmatpush1.msra.mxu0 0.0
    %85 = vmatprep.subr.mxu0 0.0
    %86 = vmatpush1.msra.mxu0 0.0
    %87 = vmatprep.subr.mxu0 0.0
    %88 = vmatpush1.msra.mxu0 0.0
    %89 = vmatprep.subr.mxu0 0.0
    %90 = vmatpush1.msra.mxu0 0.0
    %91 = vmatprep.subr.mxu0 0.0
    %92 = vmatpush1.msra.mxu0 0.0
    %93 = vmatprep.subr.mxu0 0.0
    %94 = vmatpush1.msra.mxu0 0.0
    %95 = vmatprep.subr.mxu0 0.0
    %96 = vmatpush1.msra.mxu0 0.0
    %97 = vmatprep.subr.mxu0 0.0
    %98 = vmatpush1.msra.mxu0 0.0
    %99 = vmatprep.subr.mxu0 0.0
    %100 = vmatpush1.msra.mxu0 0.0
    %101 = vmatprep.subr.mxu0 0.0
    %102 = vmatpush1.msra.mxu0 0.0
    %103 = vmatprep.subr.mxu0 0.0
    %104 = vmatpush1.msra.mxu0 0.0
    %105 = vmatprep.subr.mxu0 0.0
    %106 = vmatpush1.msra.mxu0 0.0
    %107 = vmatprep.subr.mxu0 0.0
    %108 = vmatpush1.msra.mxu0 0.0
    %109 = vmatprep.subr.mxu0 0.0
    %110 = vmatpush1.msra.mxu0 0.0
    %111 = vmatprep.subr.mxu0 0.0
    %112 = vmatpush1.msra.mxu0 0.0
    %113 = vmatprep.subr.mxu0 0.0
    %114 = vmatpush1.msra.mxu0 0.0
    %115 = vmatprep.subr.mxu0 0.0
    %116 = vmatpush1.msra.mxu0 0.0
    %117 = vmatprep.subr.mxu0 0.0
    %118 = vmatpush1.msra.mxu0 0.0
    %119 = vmatprep.subr.mxu0 0.0
    %120 = vmatpush1.msra.mxu0 0.0
    %121 = vmatprep.subr.mxu0 0.0
    %122 = vmatpush1.msra.mxu0 0.0
    %123 = vmatprep.subr.mxu0 0.0
    %124 = vmatpush1.msra.mxu0 0.0
    %125 = vmatprep.subr.mxu0 0.0
    %126 = vmatpush1.msra.mxu0 0.0
    %127 = vmatprep.mubr.f32.mxu0 0.0
    %128 = vmatmul.mubr.f32.gmra.mrb[0].mxu0 %v58
    %v129 = vpop.f32.mrb[0].mxu0
    %v130 = vadd.f32 %v54, %v129
    %v131 = vpop.f32.mrb[0].mxu0
    %132 = vmatprep.mubr.f32.mxu0 0.0
    %133 = vmatmul.mubr.f32.gmra.mrb[0].mxu0 %v61
    %v134 = vpop.f32.mrb[0].mxu0
    %v135 = vadd.f32 %v54, %v134
    %v136 = vpop.f32.mrb[0].mxu0
    %137 = vdwg.mxu0
    %v138 = vmax.f32 %v130, 0.0
    %v139 = vmax.f32 %v135, 0.0
    %vm140 = vcmask 523264
    %141 = vst.msk [vmem:[#allocation7] sm:$0xff] %vm140, %v138
    %142 = vst.msk [vmem:[#allocation7 + $0x8] sm:$0xff] %vm140, %v139
    // Predicated region
    $region22: #{tpu_custom_call.1} parent=1 // pred_check
      _
    $region23: #{tpu_custom_call.1} parent=1 // pred_check_branch
      %144 = sbr.rel (0) target = $region25
    $region24: #{tpu_custom_call.1} parent=1 // pred_region
      %s146 = ssub.s32 256, 256
      %147 = vsyncadd [#allocation4], %s146
      %s148 = sshll.u32 [#allocation7], 4
      %s149 = int_to_ptr.vmem [resolvable:$true] %s148
      %154 = dma.vmem_to_hbm [thread:$0]  %s149, 256, %s3, [#allocation4], 128, 128, 8
    $region25: #{tpu_custom_call.1} parent=1 // pred_fallthru
      _
    // Predicated region
    $region26: #{tpu_custom_call.1} parent=1 // pred_check
      _
    $region27: #{tpu_custom_call.1} parent=1 // pred_check_branch
      %156 = sbr.rel (0) target = $region29
    $region28: #{tpu_custom_call.1} parent=1 // pred_region
      %157 = dma.done [#allocation4], 256
    $region29: #{tpu_custom_call.1} parent=1 // pred_fallthru
      _
    %158 = vsyncpa [#allocation3], 1
    %159 = vsyncpa [#allocation6], 1
    %160 = vsyncpa [#allocation4], 1

// kernel: tpu_custom_call.1
$region0: #{tpu_custom_call.1}
  #allocation0 [shape = 'u32[]', space=smem, size = 0x4, offset = 0x4, fixed_abs, tag = 'smem constant byte address 0x4 - core index']
  #allocation1 [shape = 'u32[144,128]{1,0:T(1,128)}', space=vmem, size = 0x12000, scoped, tag = 'internal scratch']
  %s0 = inlined_call_operand.hbm [shape: f32[16,32], index: 0, kind: input, shape index: {}]
  %s1 = inlined_call_operand.hbm [shape: f32[32,64], index: 1, kind: input, shape index: {}]
  %s2 = inlined_call_operand.vmem [shape: f32[1,64], index: 2, kind: input, shape index: {}]
  %s3 = inlined_call_operand.hbm [shape: f32[16,64], index: 3, kind: output, shape index: {}]
  %s4 = sld [smem:[#allocation0]]
  $region30: #{tpu_custom_call.1} parent=0
    _
  %s6 = ssub.s32 1, %s4
  %s7 = scalar_select 0, %s6, %s4
  $region1: #{tpu_custom_call.1} parent=0
    #allocation2 [shape = 'u8[8192]{0}', space=vmem, size = 0x2000, scoped, tag = 'input window, operand 0, single buffered']
    #allocation3 [shape = 's32[1]{0}', space=sflag, size = 0x4, scoped, tag = 'scoped memory for tpu_custom_call.1']
    #allocation4 [shape = 's32[1]{0}', space=sflag, size = 0x4, scoped, tag = 'scoped memory for tpu_custom_call.1']
    #allocation5 [shape = 'u8[16384]{0}', space=vmem, size = 0x4000, scoped, tag = 'input window, operand 1, single buffered']
    #allocation6 [shape = 's32[1]{0}', space=sflag, size = 0x4, scoped, tag = 'scoped memory for tpu_custom_call.1']
    #allocation7 [shape = 'u8[8192]{0}', space=vmem, size = 0x2000, scoped, tag = 'output window, operand 0, single buffered']
    %8 = vsyncpa [#allocation3], 0
    %9 = vsyncpa [#allocation6], 0
    %10 = vsyncpa [#allocation4], 0
    // Predicated region
    $region2: #{tpu_custom_call.1} parent=1 // pred_check
      _
    $region3: #{tpu_custom_call.1} parent=1 // pred_check_branch
      %12 = sbr.rel (0) target = $region5
    $region4: #{tpu_custom_call.1} parent=1 // pred_region
      %s14 = ssub.s32 256, 256
      %15 = vsyncadd [#allocation3], %s14
      %s16 = sshll.u32 [#allocation2], 4
      %s17 = int_to_ptr.vmem [resolvable:$true] %s16
      %22 = dma.hbm_to_vmem [thread:$0]  %s0, 256, %s17, [#allocation3], 128, 128, 8
    $region5: #{tpu_custom_call.1} parent=1 // pred_fallthru
      _
    // Predicated region
    $region6: #{tpu_custom_call.1} parent=1 // pred_check
      _
    $region7: #{tpu_custom_call.1} parent=1 // pred_check_branch
      %24 = sbr.rel (0) target = $region9
    $region8: #{tpu_custom_call.1} parent=1 // pred_region
      %s26 = ssub.s32 512, 512
      %27 = vsyncadd [#allocation6], %s26
      %s28 = sshll.u32 [#allocation5], 4
      %s29 = int_to_ptr.vmem [resolvable:$true] %s28
      %34 = dma.hbm_to_vmem [thread:$0]  %s1, 512, %s29, [#allocation6], 128, 128, 8
    $region9: #{tpu_custom_call.1} parent=1 // pred_fallthru
      _
    // Predicated region
    $region10: #{tpu_custom_call.1} parent=1 // pred_check
      _
    $region11: #{tpu_custom_call.1} parent=1 // pred_check_branch
      %36 = sbr.rel (0) target = $region13
    $region12: #{tpu_custom_call.1} parent=1 // pred_region
      _
    $region13: #{tpu_custom_call.1} parent=1 // pred_fallthru
      _
    // Predicated region
    $region14: #{tpu_custom_call.1} parent=1 // pred_check
      _
    $region15: #{tpu_custom_call.1} parent=1 // pred_check_branch
      %38 = sbr.rel (0) target = $region17
    $region16: #{tpu_custom_call.1} parent=1 // pred_region
      %39 = dma.done [#allocation3], 256
    $region17: #{tpu_custom_call.1} parent=1 // pred_fallthru
      _
    // Predicated region
    $region18: #{tpu_custom_call.1} parent=1 // pred_check
      _
    $region19: #{tpu_custom_call.1} parent=1 // pred_check_branch
      %41 = sbr.rel (0) target = $region21
    $region20: #{tpu_custom_call.1} parent=1 // pred_region
      %42 = dma.done [#allocation6], 512
    $region21: #{tpu_custom_call.1} parent=1 // pred_fallthru
      _
    %v43 = vld [vmem:[#allocation2] sm:$0xff]
    %v44 = vld [vmem:[#allocation2 + $0x8] sm:$0xff]
    %v45 = vld [vmem:[#allocation5] sm:$0xff]
    %v46 = vld [vmem:[#allocation5 + $0x8] sm:$0xff]
    %v47 = vld [vmem:[#allocation5 + $0x10] sm:$0xff]
    %v48 = vld [vmem:[#allocation5 + $0x18] sm:$0xff]
    %v49 = vld [vmem:[%s2] sm:$0x1]
    %v51 = vlaneseq
    %v52 = vshrl.u32 %v51, 7
    %v53 = vsub.s32 0, %v52
    %v54 = vrot.slane %v49, %v53
    %vm56 = vcmask 261120
    %v58 = vsel %vm56, %v43, 0
    %v61 = vsel %vm56, %v44, 0
    %63 = vmatprep.subr.mxu0 0.0
    %64 = vmatpush1.msra.mxu0 %v45
    %65 = vmatprep.subr.mxu0 0.0
    %66 = vmatpush1.msra.mxu0 %v46
    %67 = vmatprep.subr.mxu0 0.0
    %68 = vmatpush1.msra.mxu0 %v47
    %69 = vmatprep.subr.mxu0 0.0
    %70 = vmatpush1.msra.mxu0 %v48
    %71 = vmatprep.subr.mxu0 0.0
    %72 = vmatpush1.msra.mxu0 0.0
    %73 = vmatprep.subr.mxu0 0.0
    %74 = vmatpush1.msra.mxu0 0.0
    %75 = vmatprep.subr.mxu0 0.0
    %76 = vmatpush1.msra.mxu0 0.0
    %77 = vmatprep.subr.mxu0 0.0
    %78 = vmatpush1.msra.mxu0 0.0
    %79 = vmatprep.subr.mxu0 0.0
    %80 = vmatpush1.msra.mxu0 0.0
    %81 = vmatprep.subr.mxu0 0.0
    %82 = vmatpush1.msra.mxu0 0.0
    %83 = vmatprep.subr.mxu0 0.0
    %84 = vmatpush1.msra.mxu0 0.0
    %85 = vmatprep.subr.mxu0 0.0
    %86 = vmatpush1.msra.mxu0 0.0
    %87 = vmatprep.subr.mxu0 0.0
    %88 = vmatpush1.msra.mxu0 0.0
    %89 = vmatprep.subr.mxu0 0.0
    %90 = vmatpush1.msra.mxu0 0.0
    %91 = vmatprep.subr.mxu0 0.0
    %92 = vmatpush1.msra.mxu0 0.0
    %93 = vmatprep.subr.mxu0 0.0
    %94 = vmatpush1.msra.mxu0 0.0
    %95 = vmatprep.subr.mxu0 0.0
    %96 = vmatpush1.msra.mxu0 0.0
    %97 = vmatprep.subr.mxu0 0.0
    %98 = vmatpush1.msra.mxu0 0.0
    %99 = vmatprep.subr.mxu0 0.0
    %100 = vmatpush1.msra.mxu0 0.0
    %101 = vmatprep.subr.mxu0 0.0
    %102 = vmatpush1.msra.mxu0 0.0
    %103 = vmatprep.subr.mxu0 0.0
    %104 = vmatpush1.msra.mxu0 0.0
    %105 = vmatprep.subr.mxu0 0.0
    %106 = vmatpush1.msra.mxu0 0.0
    %107 = vmatprep.subr.mxu0 0.0
    %108 = vmatpush1.msra.mxu0 0.0
    %109 = vmatprep.subr.mxu0 0.0
    %110 = vmatpush1.msra.mxu0 0.0
    %111 = vmatprep.subr.mxu0 0.0
    %112 = vmatpush1.msra.mxu0 0.0
    %113 = vmatprep.subr.mxu0 0.0
    %114 = vmatpush1.msra.mxu0 0.0
    %115 = vmatprep.subr.mxu0 0.0
    %116 = vmatpush1.msra.mxu0 0.0
    %117 = vmatprep.subr.mxu0 0.0
    %118 = vmatpush1.msra.mxu0 0.0
    %119 = vmatprep.subr.mxu0 0.0
    %120 = vmatpush1.msra.mxu0 0.0
    %121 = vmatprep.subr.mxu0 0.0
    %122 = vmatpush1.msra.mxu0 0.0
    %123 = vmatprep.subr.mxu0 0.0
    %124 = vmatpush1.msra.mxu0 0.0
    %125 = vmatprep.subr.mxu0 0.0
    %126 = vmatpush1.msra.mxu0 0.0
    %127 = vmatprep.mubr.f32.mxu0 0.0
    %128 = vmatmul.mubr.f32.gmra.mrb[0].mxu0 %v58
    %v129 = vpop.f32.mrb[0].mxu0
    %v130 = vadd.f32 %v54, %v129
    %v131 = vpop.f32.mrb[0].mxu0
    %132 = vmatprep.mubr.f32.mxu0 0.0
    %133 = vmatmul.mubr.f32.gmra.mrb[0].mxu0 %v61
    %v134 = vpop.f32.mrb[0].mxu0
    %v135 = vadd.f32 %v54, %v134
    %v136 = vpop.f32.mrb[0].mxu0
    %137 = vdwg.mxu0
    %v138 = vmax.f32 %v130, 0.0
    %v139 = vmax.f32 %v135, 0.0
    %vm140 = vcmask 523264
    %141 = vst.msk [vmem:[#allocation7] sm:$0xff] %vm140, %v138
    %142 = vst.msk [vmem:[#allocation7 + $0x8] sm:$0xff] %vm140, %v139
    // Predicated region
    $region22: #{tpu_custom_call.1} parent=1 // pred_check
      _
    $region23: #{tpu_custom_call.1} parent=1 // pred_check_branch
      %144 = sbr.rel (0) target = $region25
    $region24: #{tpu_custom_call.1} parent=1 // pred_region
      %s146 = ssub.s32 256, 256
      %147 = vsyncadd [#allocation4], %s146
      %s148 = sshll.u32 [#allocation7], 4
      %s149 = int_to_ptr.vmem [resolvable:$true] %s148
      %154 = dma.vmem_to_hbm [thread:$0]  %s149, 256, %s3, [#allocation4], 128, 128, 8
    $region25: #{tpu_custom_call.1} parent=1 // pred_fallthru
      _
    // Predicated region
    $region26: #{tpu_custom_call.1} parent=1 // pred_check
      _
    $region27: #{tpu_custom_call.1} parent=1 // pred_check_branch
      %156 = sbr.rel (0) target = $region29
    $region28: #{tpu_custom_call.1} parent=1 // pred_region
      %157 = dma.done [#allocation4], 256
    $region29: #{tpu_custom_call.1} parent=1 // pred_fallthru
      _
    %158 = vsyncpa [#allocation3], 1
    %159 = vsyncpa [#allocation6], 1
    %160 = vsyncpa [#allocation4], 1

</llo_original>
